<compile_context>
chip_gen: v7x
topology: tpu7x:2x2x1
jax: 0.10.0
libtpu: 0.0.40
codegen_flags: <defaults>
</compile_context>

<pallas_src>
import functools
import math

import jax
import jax.numpy as jnp
from jax import lax
from jax.experimental import pallas as pl
from jax.experimental.pallas import tpu as pltpu


def _ru(x, m):
    return (x + m - 1) // m * m


# ----------------------------------------------------------------------------
# Kernel 1: fused time-shift + addcmul  ->  xr/xw/xk/xv/xa/xg  (bf16 output)
#   grid (B, C/CB, T/TB); the shifted row crossing a T-block boundary is
#   carried in a (1, CB) VMEM scratch (T axis is "arbitrary"/sequential).
# ----------------------------------------------------------------------------
def _addcmul_kernel(x_ref, mix_ref, o_ref, prev_ref):
    TB = x_ref.shape[0]
    tb = pl.program_id(2)

    @pl.when(tb == 0)
    def _():
        prev_ref[...] = jnp.zeros_like(prev_ref)

    mix = mix_ref[...][:, None, :]                       # (6, 1, CB)
    row0 = x_ref[pl.ds(0, 1), :]                         # (1, CB)
    prev0 = prev_ref[...]                                # last row of prev block (or 0)
    o_ref[:, pl.ds(0, 1), :] = (
        row0[None] + (prev0 - row0)[None] * mix).astype(o_ref.dtype)
    if TB > 1:
        cur = x_ref[pl.ds(1, TB - 1), :]                 # x[1:]
        prv = x_ref[pl.ds(0, TB - 1), :]                 # x[:-1]  (shifted rows)
        o_ref[:, pl.ds(1, TB - 1), :] = (
            cur[None] + (prv - cur)[None] * mix).astype(o_ref.dtype)
    prev_ref[...] = x_ref[pl.ds(TB - 1, 1), :]           # carry into next T block


def shift_addcmul(x, mix):
    B, T, C = x.shape
    CB = C
    for cand in (512, 256, 128):
        if C > cand and C % cand == 0:
            CB = cand
            break
    TB = T
    for cand in (256, 128, 64, 32, 16):
        if T > cand and T % cand == 0:
            TB = cand
            break
    return pl.pallas_call(
        _addcmul_kernel,
        out_shape=jax.ShapeDtypeStruct((6, B, T, C), jnp.bfloat16),
        grid=(B, C // CB, T // TB),
        in_specs=[
            pl.BlockSpec((None, TB, CB), lambda b, c, t: (b, t, c)),
            pl.BlockSpec((6, CB), lambda b, c, t: (0, c)),
        ],
        out_specs=pl.BlockSpec((6, None, TB, CB), lambda b, c, t: (0, b, t, c)),
        scratch_shapes=[pltpu.VMEM((1, CB), jnp.float32)],
        compiler_params=pltpu.CompilerParams(
            dimension_semantics=("parallel", "parallel", "arbitrary")),
    )(x, mix)


# ----------------------------------------------------------------------------
# Kernel 2: tiled bf16 matmul with f32 accumulation (big C x C projections).
#   Operands are pre-cast to bf16 once in the wrapper (no per-tile casts).
# ----------------------------------------------------------------------------
def _matmul_kernel(a_ref, b_ref, o_ref, acc_ref):
    @pl.when(pl.program_id(2) == 0)
    def _():
        acc_ref[...] = jnp.zeros_like(acc_ref)

    acc_ref[...] += jnp.dot(a_ref[...], b_ref[...],
                            preferred_element_type=jnp.float32)

    @pl.when(pl.program_id(2) == pl.num_programs(2) - 1)
    def _():
        o_ref[...] = acc_ref[...].astype(o_ref.dtype)


def pallas_matmul(a, b, out_dtype=jnp.float32):
    M, K = a.shape
    K2, N = b.shape
    assert K == K2
    a = a.astype(jnp.bfloat16)
    b = b.astype(jnp.bfloat16)
    TM = 512 if M > 512 else M
    TN = 256 if N > 256 else N
    TK = 1024 if K > 1024 else K
    Mp, Np, Kp = _ru(M, TM), _ru(N, TN), _ru(K, TK)
    a_p = a if (Mp == M and Kp == K) else jnp.pad(a, ((0, Mp - M), (0, Kp - K)))
    b_p = b if (Kp == K and Np == N) else jnp.pad(b, ((0, Kp - K), (0, Np - N)))
    out = pl.pallas_call(
        _matmul_kernel,
        out_shape=jax.ShapeDtypeStruct((Mp, Np), out_dtype),
        grid=(Mp // TM, Np // TN, Kp // TK),
        in_specs=[pl.BlockSpec((TM, TK), lambda i, j, k: (i, k)),
                  pl.BlockSpec((TK, TN), lambda i, j, k: (k, j))],
        out_specs=pl.BlockSpec((TM, TN), lambda i, j, k: (i, j)),
        scratch_shapes=[pltpu.VMEM((TM, TN), jnp.float32)],
        compiler_params=pltpu.CompilerParams(
            dimension_semantics=("parallel", "parallel", "arbitrary"),
            vmem_limit_bytes=32 * 1024 * 1024),
    )(a_p, b_p)
    return out[:M, :N] if (Mp != M or Np != N) else out


# ----------------------------------------------------------------------------
# Kernel 3: fused LoRA chain, bf16 matmuls with f32 accumulation.
#   mode "w"  : f_in = tanh,    f_out = exp(-exp(-softplus(-(w0 + .)) - 0.5))
#   mode "sig": f_in = id,      f_out = sigmoid(bias + .)
#   mode "g"  : f_in = sigmoid, f_out = id
# ----------------------------------------------------------------------------
def _lora_kernel(x_ref, w1_ref, w2_ref, b_ref, o_ref, *, mode):
    x = x_ref[...]                                        # bf16
    h = jnp.dot(x, w1_ref[...], preferred_element_type=jnp.float32)
    if mode == "w":
        h = jnp.tanh(h)
    elif mode == "g":
        h = jax.nn.sigmoid(h)
    y = jnp.dot(h.astype(jnp.bfloat16), w2_ref[...],
                preferred_element_type=jnp.float32)
    if mode == "w":
        y = -jax.nn.softplus(-(b_ref[...] + y)) - 0.5
        y = jnp.exp(-jnp.exp(y))                          # decay precomputed here
    elif mode == "sig":
        y = jax.nn.sigmoid(b_ref[...] + y)
    o_ref[...] = y


def lora_fused(x, w1, w2, bias, mode):
    M, C = x.shape
    D = w1.shape[1]
    TM = 256 if M > 256 else M
    Mp = _ru(M, TM)
    x_p = x if Mp == M else jnp.pad(x, ((0, Mp - M), (0, 0)))
    b2 = (bias if bias is not None else jnp.zeros((C,), jnp.float32)).reshape(1, C)
    out = pl.pallas_call(
        functools.partial(_lora_kernel, mode=mode),
        out_shape=jax.ShapeDtypeStruct((Mp, C), jnp.float32),
        grid=(Mp // TM,),
        in_specs=[pl.BlockSpec((TM, C), lambda i: (i, 0)),
                  pl.BlockSpec((C, D), lambda i: (0, 0)),
                  pl.BlockSpec((D, C), lambda i: (0, 0)),
                  pl.BlockSpec((1, C), lambda i: (0, 0))],
        out_specs=pl.BlockSpec((TM, C), lambda i: (i, 0)),
        compiler_params=pltpu.CompilerParams(
            dimension_semantics=("parallel",),
            vmem_limit_bytes=32 * 1024 * 1024),
    )(x_p, w1.astype(jnp.bfloat16), w2.astype(jnp.bfloat16), b2)
    return out[:M] if Mp != M else out


# ----------------------------------------------------------------------------
# Kernel 4: RWKV-7 WKV recurrence (RUN_CUDA_RWKV7g) with fused:
#   prologue : kk = k*k_k, per-head L2-norm, k' = k*(1+(a-1)*k_a)
#   recurrence: S = S*exp(-exp(w)) - (S@kk^T)*(kk*a) + v^T k' ; out = S@r^T
#   epilogue : GroupNorm(H) + (r*k'*r_k).sum * v residual + g gate -> bf16
# Blocks are (T_chunk, HP*N): HP heads packed on the lane axis, time on
# sublanes, state carried across T chunks in VMEM scratch.
# ----------------------------------------------------------------------------
_NT = (((1,), (1,)), ((), ()))   # contract last dims of both operands: A @ B^T


def _wkv7_kernel(kk_row_ref, ka_row_ref, rk_row_ref, gnw_ref, gnb_ref, hm_ref,
                 r_ref, wdec_ref, k_ref, v_ref, a_ref, g_ref,
                 o_ref,
                 s_ref, kkn_ref, kn_ref, oacc_ref, *, HP, N, eps):
    TC, HPN = r_ref.shape
    tc = pl.program_id(2)

    @pl.when(tc == 0)
    def _():
        s_ref[...] = jnp.zeros_like(s_ref)

    # ---- prologue: fold the former XLA glue (per chunk, elementwise + 1 MXU op)
    k_raw = k_ref[...]                                    # (TC, HPN) f32
    a_c = a_ref[...]
    kk = k_raw * kk_row_ref[...]                          # k * k_k
    ss = jnp.dot(kk * kk, hm_ref[...],
                 preferred_element_type=jnp.float32)      # per-head sum of squares
    kkn_ref[...] = kk / jnp.maximum(jnp.sqrt(ss), 1e-12)  # per-head L2-normalized
    kn_ref[...] = k_raw * (1.0 + (a_c - 1.0) * ka_row_ref[...])

    eye = jnp.eye(N, dtype=jnp.float32)                   # row -> column on the MXU
    init = tuple(s_ref[h] for h in range(HP))

    def body(t, states):
        new_states = []
        outs = []
        for h in range(HP):               # HP independent chains -> ILP
            off = h * N
            r_t = r_ref[pl.ds(t, 1), pl.ds(off, N)]
            w_t = wdec_ref[pl.ds(t, 1), pl.ds(off, N)]    # exp(-exp(w)), precomputed
            kk_t = kkn_ref[pl.ds(t, 1), pl.ds(off, N)]
            a_t = a_ref[pl.ds(t, 1), pl.ds(off, N)]
            kn_t = kn_ref[pl.ds(t, 1), pl.ds(off, N)]
            v_t = v_ref[pl.ds(t, 1), pl.ds(off, N)]
            S = states[h]
            sa = lax.dot_general(S, kk_t, _NT, preferred_element_type=jnp.float32)   # (N,1)
            vc = lax.dot_general(eye, v_t, _NT, preferred_element_type=jnp.float32)  # (N,1)
            # aa = -kk, bb = kk*a  ->  sa_ab = (S @ aa^T) * bb = -(S @ kk^T)*(kk*a)
            S = S * w_t - sa * (kk_t * a_t) + vc * kn_t
            out_h = lax.dot_general(r_t, S, _NT, preferred_element_type=jnp.float32)  # (1,N)
            outs.append(out_h)
            new_states.append(S)
        row = outs[0] if HP == 1 else jnp.concatenate(outs, axis=-1)   # lane-dense (1,HPN)
        oacc_ref[pl.ds(t, 1), :] = row
        return tuple(new_states)

    final = lax.fori_loop(0, TC, body, init, unroll=2)
    for h in range(HP):
        s_ref[h] = final[h]

    # ---- fused GroupNorm(H groups) + (r*k'*r_k).sum * v residual + g gate ----
    hm = hm_ref[...]
    inv_n = 1.0 / N
    xw = oacc_ref[...]                                                  # (TC, HPN) f32
    mean = jnp.dot(xw, hm, preferred_element_type=jnp.float32) * inv_n
    xc = xw - mean
    var = jnp.dot(xc * xc, hm, preferred_element_type=jnp.float32) * inv_n
    gn = xc * lax.rsqrt(var + eps) * gnw_ref[...] + gnb_ref[...]
    rkv = r_ref[...] * kn_ref[...] * rk_row_ref[...]
    coef = jnp.dot(rkv, hm, preferred_element_type=jnp.float32)         # per-head sum
    o_ref[...] = ((gn + coef * v_ref[...]) * g_ref[...]).astype(o_ref.dtype)


def wkv7_fused(r, wdec, k, v, a, g, kk_row, ka_row, rk_row, gnw_row, gnb_row,
               H, N, eps):
    B, T, C = r.shape
    # heads packed per grid step so the lane width is (ideally) 128
    HP = max(1, min(H, 128 // N)) if N <= 128 else 1
    while H % HP != 0:
        HP -= 1
    HPN = HP * N
    HB = H // HP

    # chunk T (state carried in scratch); pad the tail if T is not divisible —
    # the recurrence is causal so padded trailing timesteps never affect valid ones.
    TC = min(T, 128)
    Tp = _ru(T, TC)
    if Tp != T:
        pad = Tp - T
        padf = lambda t: jnp.pad(t, ((0, 0), (0, pad), (0, 0)))
        r, wdec, k, v, a, g = map(padf, (r, wdec, k, v, a, g))
    NTC = Tp // TC

    hm = (jnp.arange(HPN)[:, None] // N ==
          jnp.arange(HPN)[None, :] // N).astype(jnp.float32)            # (HPN, HPN)

    act_spec = pl.BlockSpec((None, TC, HPN), lambda b, hb, t: (b, t, hb))
    par_spec = pl.BlockSpec((1, HPN), lambda b, hb, t: (0, hb))
    hm_spec = pl.BlockSpec((HPN, HPN), lambda b, hb, t: (0, 0))
    kern = functools.partial(_wkv7_kernel, HP=HP, N=N, eps=eps)
    out = pl.pallas_call(
        kern,
        out_shape=jax.ShapeDtypeStruct((B, Tp, C), jnp.bfloat16),
        grid=(B, HB, NTC),
        in_specs=[par_spec] * 5 + [hm_spec] + [act_spec] * 6,
        out_specs=act_spec,
        scratch_shapes=[pltpu.VMEM((HP, N, N), jnp.float32),   # state
                        pltpu.VMEM((TC, HPN), jnp.float32),    # kk (normalized)
                        pltpu.VMEM((TC, HPN), jnp.float32),    # k'
                        pltpu.VMEM((TC, HPN), jnp.float32)],   # f32 chunk output
        compiler_params=pltpu.CompilerParams(
            dimension_semantics=("parallel", "parallel", "arbitrary")),
    )(kk_row, ka_row, rk_row, gnw_row, gnb_row, hm, r, wdec, k, v, a, g)
    return out[:, :T] if Tp != T else out


# ----------------------------------------------------------------------------
# Parameter init (deterministic; mirrors RWKV_Tmix_x070.__init__ shapes)
# ----------------------------------------------------------------------------
def init_params(key, C, H, N, n_layer, layer_id):
    r01 = layer_id / (n_layer - 1) if n_layer > 1 else 0.0
    r10 = 1.0 - layer_id / n_layer
    ddd = jnp.arange(C, dtype=jnp.float32) / C
    p = {}
    p["x_r"] = 1.0 - ddd ** (0.2 * r10)
    p["x_w"] = 1.0 - ddd ** (0.9 * r10)
    p["x_k"] = 1.0 - (ddd ** (0.9 * r10) + 0.4 * r01)
    p["x_v"] = 1.0 - (ddd ** (0.4 * r10) + 0.6 * r01)
    p["x_a"] = 1.0 - ddd ** (0.9 * r10)
    p["x_g"] = 1.0 - ddd ** (0.2 * r10)

    D_DECAY = max(32, int(round(1.8 * C ** 0.5 / 32) * 32))
    D_AAA = max(32, int(round(1.8 * C ** 0.5 / 32) * 32))
    D_MV = max(32, int(round(1.3 * C ** 0.5 / 32) * 32))
    D_GATE = max(32, int(round(0.6 * C ** 0.8 / 32) * 32))
    if C == 1024:
        D_GATE = 128

    n_idx = jnp.arange(C, dtype=jnp.float32)
    decay_speed = -7.0 + 5.0 * (n_idx / (C - 1)) ** (0.85 + 1.0 * r01 ** 0.5)
    p["w0"] = decay_speed + 0.5

    ks = jax.random.split(key, 16)

    def rnd(k, shape, scale):
        return scale * jax.random.normal(k, shape, jnp.float32)

    p["w1"] = rnd(ks[0], (C, D_DECAY), 0.1)
    p["w2"] = rnd(ks[1], (D_DECAY, C), 0.1)
    p["a1"] = rnd(ks[2], (C, D_AAA), 0.1)
    p["a2"] = rnd(ks[3], (D_AAA, C), 0.1)
    p["a0"] = jnp.zeros((C,), jnp.float32)
    p["v1"] = rnd(ks[4], (C, D_MV), 0.1)
    p["v2"] = rnd(ks[5], (D_MV, C), 0.1)
    p["v0"] = jnp.ones((C,), jnp.float32)
    p["g1"] = rnd(ks[6], (C, D_GATE), 0.1)
    p["g2"] = rnd(ks[7], (D_GATE, C), 0.1)
    p["k_k"] = 0.85 * jnp.ones((C,), jnp.float32)
    p["k_a"] = jnp.ones((C,), jnp.float32)
    p["r_k"] = rnd(ks[8], (H, N), 0.1)

    s = 1.0 / math.sqrt(C)
    p["W_r"] = rnd(ks[9], (C, C), s)
    p["W_k"] = rnd(ks[10], (C, C), s)
    p["W_v"] = rnd(ks[11], (C, C), s)
    p["W_o"] = rnd(ks[12], (C, C), s)
    p["gn_w"] = 1.0 + rnd(ks[13], (C,), 0.1)
    p["gn_b"] = rnd(ks[14], (C,), 0.1)
    return p


# ----------------------------------------------------------------------------
# Forward pass (Pallas kernels + thin JAX glue)
# ----------------------------------------------------------------------------
def rwkv_tmix_forward(p, x, v_first, layer_id, H, N, eps, attention_mask=None):
    B, T, C = x.shape
    if attention_mask is not None:
        x = x * attention_mask[:, -T:, None]

    mix = jnp.stack([p["x_r"], p["x_w"], p["x_k"], p["x_v"], p["x_a"], p["x_g"]], axis=0)
    six = shift_addcmul(x, mix)                              # (6, B, T, C) bf16
    xr, xw, xk, xv, xa, xg = [six[i].reshape(B * T, C) for i in range(6)]

    bf = jnp.bfloat16
    Wr, Wk, Wv, Wo = (p["W_r"].astype(bf), p["W_k"].astype(bf),
                      p["W_v"].astype(bf), p["W_o"].astype(bf))

    r = pallas_matmul(xr, Wr)
    k = pallas_matmul(xk, Wk)
    v = pallas_matmul(xv, Wv)

    wdec = lora_fused(xw, p["w1"], p["w2"], p["w0"], mode="w")   # exp(-exp(w))

    if layer_id == 0:
        v_first = v.reshape(B, T, C)
    else:
        vmix = lora_fused(xv, p["v1"], p["v2"], p["v0"], mode="sig")
        v = v + (v_first.reshape(B * T, C) - v) * vmix

    a = lora_fused(xa, p["a1"], p["a2"], p["a0"], mode="sig")
    g = lora_fused(xg, p["g1"], p["g2"], None, mode="g")

    if attention_mask is not None:
        v = v * attention_mask[:, -T:, None].reshape(B * T, 1)

    def b3(t):
        return t.reshape(B, T, C)

    post = wkv7_fused(b3(r), b3(wdec), b3(k), b3(v), b3(a), b3(g),
                      p["k_k"].reshape(1, C), p["k_a"].reshape(1, C),
                      p["r_k"].reshape(1, C), p["gn_w"].reshape(1, C),
                      p["gn_b"].reshape(1, C), H, N, eps)         # (B, T, C) bf16
    out = pallas_matmul(post.reshape(B * T, C), Wo).reshape(B, T, C)
    return out, v_first


# ----------------------------------------------------------------------------
# Pure-JAX reference (mirrors the bf16 matmul precision of the kernel path)
# ----------------------------------------------------------------------------
def _ref_wkv7(r, w, k, v, a, b, H, N):
    B, T, C = r.shape
    rs = lambda t: t.reshape(B, T, H, N)
    r, w, k, v, a, b = map(rs, (r, w, k, v, a, b))
    wdec = jnp.exp(-jnp.exp(w))

    def step(state, inp):
        r_t, w_t, k_t, v_t, a_t, b_t = inp
        sa = jnp.einsum("bhij,bhj->bhi", state, a_t)
        state = (state * w_t[:, :, None, :] + sa[..., None] * b_t[:, :, None, :]
                 + v_t[..., None] * k_t[:, :, None, :])
        out = jnp.einsum("bhij,bhj->bhi", state, r_t)
        return state, out

    inps = tuple(jnp.moveaxis(t, 1, 0) for t in (r, wdec, k, v, a, b))
    _, outs = lax.scan(step, jnp.zeros((B, H, N, N), jnp.float32), inps)
    return jnp.moveaxis(outs, 0, 1).reshape(B, T, C)


def ref_forward(p, x, v_first, layer_id, H, N, eps, attention_mask=None):
    B, T, C = x.shape
    bf = jnp.bfloat16
    if attention_mask is not None:
        x = x * attention_mask[:, -T:, None]
    xs = jnp.pad(x, ((0, 0), (1, 0), (0, 0)))[:, :T, :]
    xx = xs - x

    def mixed(m):
        return (x + xx * m).astype(bf)

    def mm(a, wgt):
        return jnp.dot(a.astype(bf), wgt.astype(bf), preferred_element_type=jnp.float32)

    def lora(xin, w1, w2, act=None):
        h = mm(xin, w1)
        if act == "tanh":
            h = jnp.tanh(h)
        elif act == "sigmoid":
            h = jax.nn.sigmoid(h)
        return mm(h, w2)

    xr, xw, xk = mixed(p["x_r"]), mixed(p["x_w"]), mixed(p["x_k"])
    xv, xa, xg = mixed(p["x_v"]), mixed(p["x_a"]), mixed(p["x_g"])
    r, k, v = mm(xr, p["W_r"]), mm(xk, p["W_k"]), mm(xv, p["W_v"])
    w = -jax.nn.softplus(-(p["w0"] + lora(xw, p["w1"], p["w2"], "tanh"))) - 0.5
    if layer_id == 0:
        v_first = v
    else:
        v = v + (v_first - v) * jax.nn.sigmoid(p["v0"] + lora(xv, p["v1"], p["v2"]))
    a = jax.nn.sigmoid(p["a0"] + lora(xa, p["a1"], p["a2"]))
    g = lora(xg, p["g1"], p["g2"], "sigmoid")
    kk = k * p["k_k"]
    kk4 = kk.reshape(B, T, H, N)
    kk = (kk4 / jnp.maximum(jnp.linalg.norm(kk4, axis=-1, keepdims=True), 1e-12)
          ).reshape(B, T, C)
    k = k * (1.0 + (a - 1.0) * p["k_a"])
    if attention_mask is not None:
        v = v * attention_mask[:, -T:, None]
    out = _ref_wkv7(r, w, k, v, -kk, kk * a, H, N)
    o2 = out.reshape(B * T, H, N)
    mean = o2.mean(-1, keepdims=True)
    var = ((o2 - mean) ** 2).mean(-1, keepdims=True)
    gn = (o2 - mean) / jnp.sqrt(var + eps)
    gn = gn * p["gn_w"].reshape(H, N) + p["gn_b"].reshape(H, N)
    outn = gn.reshape(B, T, C)
    coef = (r.reshape(B, T, H, N) * k.reshape(B, T, H, N) * p["r_k"]).sum(-1, keepdims=True)
    outn = outn + (coef * v.reshape(B, T, H, N)).reshape(B, T, C)
    final = mm((outn * g).reshape(B * T, C), p["W_o"]).reshape(B, T, C)
    return final, v_first


# ----------------------------------------------------------------------------
if __name__ == "__main__":
    B, T, C, head_size = 2, 8, 32, 16
    H = C // head_size
    n_layer, layer_id = 4, 1
    head_size_divisor = 8.0
    eps = 1e-5 * head_size_divisor ** 2

    key = jax.random.PRNGKey(0)
    kp, kx, kv = jax.random.split(key, 3)
    params = init_params(kp, C, H, head_size, n_layer, layer_id)
    x = 0.5 * jax.random.normal(kx, (B, T, C), jnp.float32)
    v_first = 0.5 * jax.random.normal(kv, (B, T, C), jnp.float32)

    out, vf = rwkv_tmix_forward(params, x, v_first, layer_id, H, head_size, eps)
    out = jax.block_until_ready(out)

    ref_out, ref_vf = ref_forward(params, x, v_first, layer_id, H, head_size, eps)
    err = float(jnp.max(jnp.abs(out - ref_out)))
    assert jnp.allclose(out, ref_out, atol=5e-3, rtol=2e-2), f"max abs err = {err}"
    assert jnp.allclose(vf, ref_vf, atol=1e-5, rtol=1e-5)
    print("KERNEL_OK")
</pallas_src>

<mosaic_0001>
module attributes {stable_mosaic.version = 11 : i64} {
  func.func @_addcmul_kernel(%arg0: i32, %arg1: i32, %arg2: i32, %arg3: memref<1x8x32xf32, #tpu.memory_space<vmem>>, %arg4: memref<6x32xf32, #tpu.memory_space<vmem>>, %arg5: memref<6x1x8x32xbf16, #tpu.memory_space<vmem>>, %arg6: memref<1x32xf32, #tpu.memory_space<vmem>>) attributes {dimension_semantics = [#tpu.dimension_semantics<parallel>, #tpu.dimension_semantics<parallel>, #tpu.dimension_semantics<arbitrary>], iteration_bounds = array<i64: 2, 1, 1>, scalar_prefetch = 0 : i64, scratch_operands = 1 : i64, tpu.core_type = #tpu.core_type<tc>, window_params = [{transform_indices = @transform_0, window_bounds = array<i64: 1, 8, 32>}, {transform_indices = @transform_1, window_bounds = array<i64: 6, 32>}, {transform_indices = @transform_2, window_bounds = array<i64: 6, 1, 8, 32>}]} {
    %c0_i32 = arith.constant 0 : i32
    %0 = arith.cmpi eq, %arg2, %c0_i32 : i32
    %1 = arith.extui %0 : i1 to i32
    %c0_i32_0 = arith.constant 0 : i32
    %2 = arith.cmpi ne, %1, %c0_i32_0 : i32
    scf.if %2 {
      %cst = arith.constant 0.000000e+00 : f32
      %38 = vector.broadcast %cst : f32 to vector<1x32xf32>
      %c0_24 = arith.constant 0 : index
      %c0_25 = arith.constant 0 : index
      %39 = vector.load %arg6[%c0_24, %c0_25] : memref<1x32xf32, #tpu.memory_space<vmem>>, vector<1x32xf32>
      tpu.vector_store %arg6[%c0_24, %c0_25], %38 {strides = array<i32>} : memref<1x32xf32, #tpu.memory_space<vmem>>, vector<1x32xf32>,
    } else {
    }
    %c0 = arith.constant 0 : index
    %c0_1 = arith.constant 0 : index
    %3 = vector.load %arg4[%c0, %c0_1] : memref<6x32xf32, #tpu.memory_space<vmem>>, vector<6x32xf32>
    %4 = vector.shape_cast %3 : vector<6x32xf32> to vector<6x1x32xf32>
    %c0_2 = arith.constant 0 : index
    %c0_3 = arith.constant 0 : index
    %c0_4 = arith.constant 0 : index
    %5 = vector.load %arg3[%c0_2, %c0_3, %c0_4] : memref<1x8x32xf32, #tpu.memory_space<vmem>>, vector<1x1x32xf32>
    %6 = vector.shape_cast %5 : vector<1x1x32xf32> to vector<1x32xf32>
    %c0_5 = arith.constant 0 : index
    %c0_6 = arith.constant 0 : index
    %7 = vector.load %arg6[%c0_5, %c0_6] : memref<1x32xf32, #tpu.memory_space<vmem>>, vector<1x32xf32>
    %8 = vector.shape_cast %6 : vector<1x32xf32> to vector<1x1x32xf32>
    %9 = arith.subf %7, %6 : vector<1x32xf32>
    %10 = vector.shape_cast %9 : vector<1x32xf32> to vector<1x1x32xf32>
    %11 = vector.broadcast %10 : vector<1x1x32xf32> to vector<6x1x32xf32>
    %12 = arith.mulf %11, %4 : vector<6x1x32xf32>
    %13 = vector.broadcast %8 : vector<1x1x32xf32> to vector<6x1x32xf32>
    %14 = arith.addf %13, %12 : vector<6x1x32xf32>
    %15 = arith.truncf %14 : vector<6x1x32xf32> to vector<6x1x32xbf16>
    %c0_7 = arith.constant 0 : index
    %c0_8 = arith.constant 0 : index
    %c0_9 = arith.constant 0 : index
    %c0_10 = arith.constant 0 : index
    %16 = vector.load %arg5[%c0_7, %c0_8, %c0_9, %c0_10] : memref<6x1x8x32xbf16, #tpu.memory_space<vmem>>, vector<6x1x1x32xbf16>
    %17 = vector.shape_cast %16 : vector<6x1x1x32xbf16> to vector<6x1x32xbf16>
    %18 = vector.shape_cast %15 : vector<6x1x32xbf16> to vector<6x1x1x32xbf16>
    tpu.vector_store %arg5[%c0_7, %c0_8, %c0_9, %c0_10], %18 {strides = array<i32>} : memref<6x1x8x32xbf16, #tpu.memory_space<vmem>>, vector<6x1x1x32xbf16>,
    %c0_11 = arith.constant 0 : index
    %c1 = arith.constant 1 : index
    %c0_12 = arith.constant 0 : index
    %19 = vector.load %arg3[%c0_11, %c1, %c0_12] : memref<1x8x32xf32, #tpu.memory_space<vmem>>, vector<1x7x32xf32>
    %20 = vector.shape_cast %19 : vector<1x7x32xf32> to vector<7x32xf32>
    %c0_13 = arith.constant 0 : index
    %c0_14 = arith.constant 0 : index
    %c0_15 = arith.constant 0 : index
    %21 = vector.load %arg3[%c0_13, %c0_14, %c0_15] : memref<1x8x32xf32, #tpu.memory_space<vmem>>, vector<1x7x32xf32>
    %22 = vector.shape_cast %21 : vector<1x7x32xf32> to vector<7x32xf32>
    %23 = vector.shape_cast %20 : vector<7x32xf32> to vector<1x7x32xf32>
    %24 = arith.subf %22, %20 : vector<7x32xf32>
    %25 = vector.shape_cast %24 : vector<7x32xf32> to vector<1x7x32xf32>
    %26 = vector.broadcast %25 : vector<1x7x32xf32> to vector<6x7x32xf32>
    %27 = vector.broadcast %4 : vector<6x1x32xf32> to vector<6x7x32xf32>
    %28 = arith.mulf %26, %27 : vector<6x7x32xf32>
    %29 = vector.broadcast %23 : vector<1x7x32xf32> to vector<6x7x32xf32>
    %30 = arith.addf %29, %28 : vector<6x7x32xf32>
    %31 = arith.truncf %30 : vector<6x7x32xf32> to vector<6x7x32xbf16>
    %c0_16 = arith.constant 0 : index
    %c0_17 = arith.constant 0 : index
    %c1_18 = arith.constant 1 : index
    %c0_19 = arith.constant 0 : index
    %32 = vector.load %arg5[%c0_16, %c0_17, %c1_18, %c0_19] : memref<6x1x8x32xbf16, #tpu.memory_space<vmem>>, vector<6x1x7x32xbf16>
    %33 = vector.shape_cast %32 : vector<6x1x7x32xbf16> to vector<6x7x32xbf16>
    %34 = vector.shape_cast %31 : vector<6x7x32xbf16> to vector<6x1x7x32xbf16>
    tpu.vector_store %arg5[%c0_16, %c0_17, %c1_18, %c0_19], %34 {strides = array<i32>} : memref<6x1x8x32xbf16, #tpu.memory_space<vmem>>, vector<6x1x7x32xbf16>,
    %c0_20 = arith.constant 0 : index
    %c7 = arith.constant 7 : index
    %c0_21 = arith.constant 0 : index
    %35 = vector.load %arg3[%c0_20, %c7, %c0_21] : memref<1x8x32xf32, #tpu.memory_space<vmem>>, vector<1x1x32xf32>
    %36 = vector.shape_cast %35 : vector<1x1x32xf32> to vector<1x32xf32>
    %c0_22 = arith.constant 0 : index
    %c0_23 = arith.constant 0 : index
    %37 = vector.load %arg6[%c0_22, %c0_23] : memref<1x32xf32, #tpu.memory_space<vmem>>, vector<1x32xf32>
    tpu.vector_store %arg6[%c0_22, %c0_23], %36 {strides = array<i32>} : memref<1x32xf32, #tpu.memory_space<vmem>>, vector<1x32xf32>,
    return
  }
  func.func @transform_0(%arg0: i32, %arg1: i32, %arg2: i32) -> (i32, i32, i32) {
    %c0_i32 = arith.constant 0 : i32
    return %arg0, %arg2, %arg1 : i32, i32, i32
  }
  func.func @transform_1(%arg0: i32, %arg1: i32, %arg2: i32) -> (i32, i32) {
    %c0_i32 = arith.constant 0 : i32
    %c0_i32_0 = arith.constant 0 : i32
    return %c0_i32, %arg1 : i32, i32
  }
  func.func @transform_2(%arg0: i32, %arg1: i32, %arg2: i32) -> (i32, i32, i32, i32) {
    %c0_i32 = arith.constant 0 : i32
    %c0_i32_0 = arith.constant 0 : i32
    return %c0_i32, %arg0, %arg2, %arg1 : i32, i32, i32, i32
  }
}

</mosaic_0001>

<llo_original>
// kernel: tpu_custom_call.1
$region0: #{tpu_custom_call.1}
  #allocation0 [shape = 'u32[]', space=smem, size = 0x4, offset = 0x4, fixed_abs, tag = 'smem constant byte address 0x4 - core index']
  #allocation1 [shape = 'u32[144,128]{1,0:T(1,128)}', space=vmem, size = 0x12000, scoped, tag = 'internal scratch']
  #allocation2 [shape = 'f32[1,32]{1,0:T(1,128)}', space=vmem, size = 0x200, scoped, tag = 'scratch operand']
  %s0 = inlined_call_operand.hbm [shape: f32[2,8,32], index: 0, kind: input, shape index: {}]
  %s1 = inlined_call_operand.hbm [shape: f32[6,32], index: 1, kind: input, shape index: {}]
  %s2 = inlined_call_operand.hbm [shape: bf16[6,2,8,32], index: 2, kind: output, shape index: {}]
  %s3 = sld [smem:[#allocation0]]
  $region53: #{tpu_custom_call.1} parent=0
    _
  %s5 = ssub.s32 1, %s3
  %s6 = scalar_select 0, %s5, %s3
  $region1: #{tpu_custom_call.1} parent=0
    #allocation3 [shape = 'u8[8192]{0}', space=vmem, size = 0x2000, scoped, tag = 'input window, operand 0']
    #allocation4 [shape = 's32[2]{0}', space=sflag, size = 0x8, scoped, tag = 'scoped memory for tpu_custom_call.1']
    #allocation5 [shape = 's32[2]{0}', space=sflag, size = 0x8, scoped, tag = 'scoped memory for tpu_custom_call.1']
    #allocation6 [shape = 'u8[4096]{0}', space=vmem, size = 0x1000, scoped, tag = 'input window, operand 1, single buffered']
    #allocation7 [shape = 's32[1]{0}', space=sflag, size = 0x4, scoped, tag = 'scoped memory for tpu_custom_call.1']
    #allocation8 [shape = 'u8[24576]{0}', space=vmem, size = 0x6000, scoped, tag = 'output window, operand 0']
    %7 = vsyncpa [#allocation4], 0
    %s8 = scalar_lea.sflag [#allocation4], 1
    %9 = vsyncpa %s8, 0
    %10 = vsyncpa [#allocation7], 0
    %11 = vsyncpa [#allocation5], 0
    %s12 = scalar_lea.sflag [#allocation5], 1
    %13 = vsyncpa %s12, 0
    loop: start=0, step=1, limit=4
    $region2: #{tpu_custom_call.1} parent=1 // loop_pre_header
      _
    $region3: #{tpu_custom_call.1} parent=1 // loop_header
      %s15 = sphi 0, %s19
      %p16 = scmp.ge.s32.totalorder %s15, 4
      %s22 = sphi 0, %s41
      %s23 = sphi 0, %s37
      %s24 = sphi 0, %s33
      %s25 = sphi 0, %s22
      %s26 = sphi 0, %s23
      %s27 = sphi 0, %s24
      %s28 = sphi 0, %s25
      %s29 = sphi 0, %s26
      %s30 = sphi 0, %s27
      %s48 = sphi 0, %s50
      %s51 = sphi 0, %s48
      %s52 = sphi 0, %s51
      %s68 = sphi 0, %s52
      %s74 = sphi 0, %s76
      %s77 = sphi 0, %s74
      %s78 = sphi 0, %s77
      %s94 = sphi 0, %s78
      %s104 = sphi 0, %s106
      %s107 = sphi 0, %s104
      %s108 = sphi 0, %s107
      %s124 = sphi 0, %s108
    $region4: #{tpu_custom_call.1} parent=1 // loop_header_branch
      %18 = sbr.rel (%p16) target = $region8
    $region5: #{tpu_custom_call.1} parent=1 // loop_body
      %s20 = ssub.s32 %s15, 1
      %s21 = ssub.s32 %s15, 2
      %s31 = sadd.s32 1, %s24
      %p32 = scmp.ge.s32.totalorder %s31, 1
      %s33 = scalar_select %p32, 0, %s31
      %s34 = sadd.s32 1, %s23
      %s35 = scalar_select %p32, %s34, %s23
      %p36 = scmp.ge.s32.totalorder %s35, 1
      %s37 = scalar_select %p36, 0, %s35
      %s38 = sadd.s32 1, %s22
      %s39 = scalar_select %p36, %s38, %s22
      %p40 = scmp.ge.s32.totalorder %s39, 2
      %s41 = scalar_select %p40, 0, %s39
      %s42 = ssub.s32 %s22, %s41
      %s43 = ssub.s32 %s24, %s33
      %s44 = sor.u32 %s42, %s43
      %s45 = ssub.s32 %s23, %s37
      %s46 = sor.u32 %s44, %s45
      %p47 = scmp.eq.s32.totalorder %s46, 0
      %s49 = sadd.s32 %s48, 1
      %s50 = scalar_select %p47, %s48, %s49
      %p53 = pneg %p47
      %p54 = scmp.eq.s32.totalorder %s15, 1
      %p55 = por %p53, %p54
      %p56 = scmp.ne.s32.totalorder %s48, %s51
      %p57 = scmp.eq.s32.totalorder %s15, 0
      %p58 = por %p56, %p57
      %p59 = scmp.ne.s32.totalorder %s48, %s51
      %p60 = scmp.eq.s32.totalorder %s20, 1
      %p61 = por %p59, %p60
      %p62 = scmp.ne.s32.totalorder %s51, %s52
      %p63 = scmp.eq.s32.totalorder %s20, 0
      %p64 = por %p62, %p63
      %p65 = scmp.ne.s32.totalorder %s51, %s52
      %p66 = scmp.eq.s32.totalorder %s21, 1
      %p67 = por %p65, %p66
      %p69 = scmp.ne.s32.totalorder %s52, %s68
      %p70 = scmp.eq.s32.totalorder %s21, 0
      %p71 = por %p69, %p70
      %s72 = ssub.s32 %s23, %s37
      %p73 = scmp.eq.s32.totalorder %s72, 0
      %s75 = sadd.s32 %s74, 1
      %s76 = scalar_select %p73, %s74, %s75
      %p79 = pneg %p73
      %p80 = scmp.eq.s32.totalorder %s15, 1
      %p81 = por %p79, %p80
      %p82 = scmp.ne.s32.totalorder %s74, %s77
      %p83 = scmp.eq.s32.totalorder %s15, 0
      %p84 = por %p82, %p83
      %p85 = scmp.ne.s32.totalorder %s74, %s77
      %p86 = scmp.eq.s32.totalorder %s20, 1
      %p87 = por %p85, %p86
      %p88 = scmp.ne.s32.totalorder %s77, %s78
      %p89 = scmp.eq.s32.totalorder %s20, 0
      %p90 = por %p88, %p89
      %p91 = scmp.ne.s32.totalorder %s77, %s78
      %p92 = scmp.eq.s32.totalorder %s21, 1
      %p93 = por %p91, %p92
      %p95 = scmp.ne.s32.totalorder %s78, %s94
      %p96 = scmp.eq.s32.totalorder %s21, 0
      %p97 = por %p95, %p96
      %s98 = ssub.s32 %s22, %s41
      %s99 = ssub.s32 %s24, %s33
      %s100 = sor.u32 %s98, %s99
      %s101 = ssub.s32 %s23, %s37
      %s102 = sor.u32 %s100, %s101
      %p103 = scmp.eq.s32.totalorder %s102, 0
      %s105 = sadd.s32 %s104, 1
      %s106 = scalar_select %p103, %s104, %s105
      %p109 = pneg %p103
      %p110 = scmp.eq.s32.totalorder %s15, 1
      %p111 = por %p109, %p110
      %p112 = scmp.ne.s32.totalorder %s104, %s107
      %p113 = scmp.eq.s32.totalorder %s15, 0
      %p114 = por %p112, %p113
      %p115 = scmp.ne.s32.totalorder %s104, %s107
      %p116 = scmp.eq.s32.totalorder %s20, 1
      %p117 = por %p115, %p116
      %p118 = scmp.ne.s32.totalorder %s107, %s108
      %p119 = scmp.eq.s32.totalorder %s20, 0
      %p120 = por %p118, %p119
      %p121 = scmp.ne.s32.totalorder %s107, %s108
      %p122 = scmp.eq.s32.totalorder %s21, 1
      %p123 = por %p121, %p122
      %p125 = scmp.ne.s32.totalorder %s108, %s124
      %p126 = scmp.eq.s32.totalorder %s21, 0
      %p127 = por %p125, %p126
      %p128 = scmp.le.s32.totalorder 1, %s15
      %p129 = scmp.lt.s32.totalorder %s15, 3
      %p130 = pnand %p128, %p129
      %p131 = pneg %p130
      // Predicated region
      $region9: #{tpu_custom_call.1} parent=5 // pred_check
        _
      $region10: #{tpu_custom_call.1} parent=5 // pred_check_branch
        %133 = sbr.rel (%p130) target = $region12
      $region11: #{tpu_custom_call.1} parent=5 // pred_region
        %s134 = ssub.s32 %s15, 1
        // Predicated region
        $region13: #{tpu_custom_call.1} parent=11 // pred_check
          %p135 = pneg %p90
        $region14: #{tpu_custom_call.1} parent=11 // pred_check_branch
          %137 = sbr.rel (%p135) target = $region16
        $region15: #{tpu_custom_call.1} parent=11 // pred_region
          %s139 = ssub.s32 128, 128
          %140 = vsyncadd [#allocation7], %s139
          %s141 = smul.addr %s26, 128
          %s142 = scalar_lea.hbm %s1, %s141
          %s144 = sshll.u32 [#allocation6], 4
          %s145 = int_to_ptr.vmem [resolvable:$true] %s144
          %147 = dma.hbm_to_vmem [thread:$0]  %s142, 128, %s145, [#allocation7]
        $region16: #{tpu_custom_call.1} parent=11 // pred_fallthru
          _
      $region12: #{tpu_custom_call.1} parent=5 // pred_fallthru
        _
      %p148 = scmp.lt.s32.totalorder %s15, 2
      // Predicated region
      $region17: #{tpu_custom_call.1} parent=5 // pred_check
        %p149 = pneg %p148
      $region18: #{tpu_custom_call.1} parent=5 // pred_check_branch
        %151 = sbr.rel (%p149) target = $region20
      $region19: #{tpu_custom_call.1} parent=5 // pred_region
        // Predicated region
        $region21: #{tpu_custom_call.1} parent=19 // pred_check
          %p152 = pneg %p58
        $region22: #{tpu_custom_call.1} parent=19 // pred_check_branch
          %154 = sbr.rel (%p152) target = $region24
        $region23: #{tpu_custom_call.1} parent=19 // pred_region
          %s155 = sand.u32 %s48, 1
          %s156 = scalar_lea.sflag [#allocation4], %s155
          %s157 = sand.u32 %s48, 1
          %s158 = smul.addr %s157, 8
          %s159 = scalar_lea.vmem [#allocation3], %s158
          %s161 = ssub.s32 128, 128
          %162 = vsyncadd %s156, %s161
          %s163 = sadd.s32 %s23, %s24
          %s164 = sadd.s32 %s163, %s22
          %s165 = smul.addr %s164, 128
          %s166 = scalar_lea.hbm %s0, %s165
          %s168 = sshll.u32 %s159, 4
          %s169 = int_to_ptr.vmem [resolvable:$true] %s168
          %171 = dma.hbm_to_vmem [thread:$0]  %s166, 128, %s169, %s156
        $region24: #{tpu_custom_call.1} parent=19 // pred_fallthru
          _
      $region20: #{tpu_custom_call.1} parent=5 // pred_fallthru
        _
      %p172 = scmp.le.s32.totalorder 1, %s15
      %p173 = scmp.lt.s32.totalorder %s15, 3
      %p174 = pnand %p172, %p173
      %p175 = pneg %p174
      // Predicated region
      $region25: #{tpu_custom_call.1} parent=5 // pred_check
        _
      $region26: #{tpu_custom_call.1} parent=5 // pred_check_branch
        %177 = sbr.rel (%p174) target = $region28
      $region27: #{tpu_custom_call.1} parent=5 // pred_region
        %s178 = ssub.s32 %s15, 1
        %s179 = sand.u32 %s51, 1
        %s180 = scalar_lea.sflag [#allocation4], %s179
        %s181 = sand.u32 %s51, 1
        %s182 = smul.addr %s181, 8
        %s183 = scalar_lea.vmem [#allocation3], %s182
        // Predicated region
        $region29: #{tpu_custom_call.1} parent=27 // pred_check
          %p184 = pneg %p64
        $region30: #{tpu_custom_call.1} parent=27 // pred_check_branch
          %186 = sbr.rel (%p184) target = $region32
        $region31: #{tpu_custom_call.1} parent=27 // pred_region
          %187 = dma.done %s180, 128
        $region32: #{tpu_custom_call.1} parent=27 // pred_fallthru
          _
        // Predicated region
        $region33: #{tpu_custom_call.1} parent=27 // pred_check
          %p188 = pneg %p90
        $region34: #{tpu_custom_call.1} parent=27 // pred_check_branch
          %190 = sbr.rel (%p188) target = $region36
        $region35: #{tpu_custom_call.1} parent=27 // pred_region
          %191 = dma.done [#allocation7], 128
        $region36: #{tpu_custom_call.1} parent=27 // pred_fallthru
          _
        %s192 = sand.u32 %s51, 1
        %s193 = scalar_lea.sflag [#allocation4], %s192
        %s194 = sand.u32 %s51, 1
        %s195 = smul.addr %s194, 8
        %s196 = scalar_lea.vmem [#allocation3], %s195
        %p197 = pneg %p64
        %p198 = pneg %p61
        %p199 = pneg %p90
        %p200 = pneg %p87
        %p201 = pneg %p120
        %p202 = pneg %p117
        %s203 = sand.u32 %s107, 1
        %s204 = scalar_lea.sflag [#allocation5], %s203
        %s205 = sand.u32 %s107, 1
        %s206 = smul.addr %s205, 24
        %s207 = scalar_lea.vmem [#allocation8], %s206
        %p208 = scmp.eq.s32.totalorder %s27, 0
        // Predicated region
        $region37: #{tpu_custom_call.1} parent=27 // pred_check
          %p209 = pneg %p208
        $region38: #{tpu_custom_call.1} parent=27 // pred_check_branch
          %211 = sbr.rel (%p209) target = $region40
        $region39: #{tpu_custom_call.1} parent=27 // pred_region
          %vm212 = vcmask 253952
          %213 = vst.msk [vmem:[#allocation2] sm:$0x1] %vm212, 0.0
        $region40: #{tpu_custom_call.1} parent=27 // pred_fallthru
          _
        %v214 = vld [vmem:[#allocation6] sm:$0x3f]
        %v216 = vcombine.high %v214, %v214
        %v218 = vunpack.c.l.s4 1966171168
        %v219 = vunpack.c.0.s8 %v218
        %v220 = vlaneseq
        %v221 = vshrl.u32 %v220, 7
        %v222 = vsub.s32 %v219, %v221
        %v223 = vrot.slane %v214, %v222
        %v225 = vunpack.c.l.s4 1966171168
        %v226 = vunpack.c.0.s8 %v225
        %v227 = vlaneseq
        %v228 = vshrl.u32 %v227, 7
        %v229 = vsub.s32 %v226, %v228
        %v230 = vrot.slane %v216, %v229
        %v231 = vcombine.high %v223, %v223
        %v232 = vcombine.high %v230, %v230
        %v234 = vunpack.c.l.s4 1966171168
        %v235 = vunpack.c.0.s8 %v234
        %v236 = vlaneseq
        %v237 = vshrl.u32 %v236, 7
        %v238 = vsub.s32 %v235, %v237
        %v239 = vrot.slane %v223, %v238
        %v241 = vunpack.c.l.s4 1966171168
        %v242 = vunpack.c.0.s8 %v241
        %v243 = vlaneseq
        %v244 = vshrl.u32 %v243, 7
        %v245 = vsub.s32 %v242, %v244
        %v246 = vrot.slane %v230, %v245
        %v248 = vunpack.c.l.s4 1966171168
        %v249 = vunpack.c.0.s8 %v248
        %v250 = vlaneseq
        %v251 = vshrl.u32 %v250, 7
        %v252 = vsub.s32 %v249, %v251
        %v253 = vrot.slane %v231, %v252
        %v255 = vunpack.c.l.s4 1966171168
        %v256 = vunpack.c.0.s8 %v255
        %v257 = vlaneseq
        %v258 = vshrl.u32 %v257, 7
        %v259 = vsub.s32 %v256, %v258
        %v260 = vrot.slane %v232, %v259
        %v261 = vcombine.high %v239, %v239
        %v262 = vcombine.high %v253, %v253
        %v269 = vld [vmem:[%s183] sm:$0x1]
        %v270 = vld [vmem:[#allocation2] sm:$0x1]
        %v271 = vsub.f32 %v270, %v269
        %v272 = vmul.f32 %v271, %v239
        %v273 = vmul.f32 %v271, %v253
        %v274 = vmul.f32 %v271, %v261
        %v275 = vmul.f32 %v271, %v262
        %v276 = vmul.f32 %v271, %v246
        %v277 = vmul.f32 %v271, %v260
        %v278 = vadd.f32 %v269, %v272
        %v279 = vadd.f32 %v269, %v273
        %v280 = vadd.f32 %v269, %v274
        %v281 = vadd.f32 %v269, %v275
        %v282 = vadd.f32 %v269, %v276
        %v283 = vadd.f32 %v269, %v277
        %v284 = vpack.c.bf16 %v278, %v278
        %v285 = vpack.c.bf16 %v279, %v279
        %v286 = vpack.c.bf16 %v280, %v280
        %v287 = vpack.c.bf16 %v281, %v281
        %v288 = vpack.c.bf16 %v282, %v282
        %v289 = vpack.c.bf16 %v283, %v283
        %vm290 = vcmask 253952
        %vm291 = vsmask.f32 256
        %vm292 = vmand %vm290, %vm291
        %v293 = vld [vmem:[%s207] sm:$0x1]
        %v294 = vsel %vm292, %v284, %v293
        %295 = vst [vmem:[%s207] sm:$0x1] %v294
        %v296 = vld [vmem:[%s207 + $0x4] sm:$0x1]
        %v297 = vsel %vm292, %v285, %v296
        %298 = vst [vmem:[%s207 + $0x4] sm:$0x1] %v297
        %v299 = vld [vmem:[%s207 + $0x8] sm:$0x1]
        %v300 = vsel %vm292, %v286, %v299
        %301 = vst [vmem:[%s207 + $0x8] sm:$0x1] %v300
        %v302 = vld [vmem:[%s207 + $0xc] sm:$0x1]
        %v303 = vsel %vm292, %v287, %v302
        %304 = vst [vmem:[%s207 + $0xc] sm:$0x1] %v303
        %v305 = vld [vmem:[%s207 + $0x10] sm:$0x1]
        %v306 = vsel %vm292, %v288, %v305
        %307 = vst [vmem:[%s207 + $0x10] sm:$0x1] %v306
        %v308 = vld [vmem:[%s207 + $0x14] sm:$0x1]
        %v309 = vsel %vm292, %v289, %v308
        %310 = vst [vmem:[%s207 + $0x14] sm:$0x1] %v309
        %v311 = vld [vmem:[%s183 + $0x1] sm:$0x7f]
        %v312 = vld [vmem:[%s183] sm:$0x7f]
        %v313 = vsub.f32 %v312, %v311
        %v314 = vlaneseq
        %v315 = vshrl.u32 %v314, 7
        %v316 = vsub.s32 0, %v315
        %v317 = vrot.slane %v239, %v316
        %v318 = vlaneseq
        %v319 = vshrl.u32 %v318, 7
        %v320 = vsub.s32 0, %v319
        %v321 = vrot.slane %v253, %v320
        %v322 = vlaneseq
        %v323 = vshrl.u32 %v322, 7
        %v324 = vsub.s32 0, %v323
        %v325 = vrot.slane %v261, %v324
        %v326 = vlaneseq
        %v327 = vshrl.u32 %v326, 7
        %v328 = vsub.s32 0, %v327
        %v329 = vrot.slane %v262, %v328
        %v330 = vlaneseq
        %v331 = vshrl.u32 %v330, 7
        %v332 = vsub.s32 0, %v331
        %v333 = vrot.slane %v246, %v332
        %v334 = vlaneseq
        %v335 = vshrl.u32 %v334, 7
        %v336 = vsub.s32 0, %v335
        %v337 = vrot.slane %v260, %v336
        %v344 = vmul.f32 %v313, %v317
        %v345 = vmul.f32 %v313, %v321
        %v346 = vmul.f32 %v313, %v325
        %v347 = vmul.f32 %v313, %v329
        %v348 = vmul.f32 %v313, %v333
        %v349 = vmul.f32 %v313, %v337
        %v350 = vadd.f32 %v311, %v344
        %v351 = vadd.f32 %v311, %v345
        %v352 = vadd.f32 %v311, %v346
        %v353 = vadd.f32 %v311, %v347
        %v354 = vadd.f32 %v311, %v348
        %v355 = vadd.f32 %v311, %v349
        %v356 = vpack.c.bf16 %v350, %v350
        %v357 = vpack.c.bf16 %v351, %v351
        %v358 = vpack.c.bf16 %v352, %v352
        %v359 = vpack.c.bf16 %v353, %v353
        %v360 = vpack.c.bf16 %v354, %v354
        %v361 = vpack.c.bf16 %v355, %v355
        %v368 = vunpack.c.l.b16 %v356
        %v369 = vunpack.c.l.b16 %v357
        %v370 = vunpack.c.l.b16 %v358
        %v371 = vunpack.c.l.b16 %v359
        %v372 = vunpack.c.l.b16 %v360
        %v373 = vunpack.c.l.b16 %v361
        %v374 = vpack.c.b16 %v368, %v368
        %v375 = vpack.c.b16 %v369, %v369
        %v376 = vpack.c.b16 %v370, %v370
        %v377 = vpack.c.b16 %v371, %v371
        %v378 = vpack.c.b16 %v372, %v372
        %v379 = vpack.c.b16 %v373, %v373
        %v381 = vshrl.u32 %v374, 16
        %v383 = vrot.slane %v381, 7
        %v384 = vshll.u32 %v374, 16
        %v386 = vor.u32 %v383, %v384
        %v388 = vshrl.u32 %v375, 16
        %v390 = vrot.slane %v388, 7
        %v391 = vshll.u32 %v375, 16
        %v393 = vor.u32 %v390, %v391
        %v395 = vshrl.u32 %v376, 16
        %v397 = vrot.slane %v395, 7
        %v398 = vshll.u32 %v376, 16
        %v400 = vor.u32 %v397, %v398
        %v402 = vshrl.u32 %v377, 16
        %v404 = vrot.slane %v402, 7
        %v405 = vshll.u32 %v377, 16
        %v407 = vor.u32 %v404, %v405
        %v409 = vshrl.u32 %v378, 16
        %v411 = vrot.slane %v409, 7
        %v412 = vshll.u32 %v378, 16
        %v414 = vor.u32 %v411, %v412
        %v416 = vshrl.u32 %v379, 16
        %v418 = vrot.slane %v416, 7
        %v419 = vshll.u32 %v379, 16
        %v421 = vor.u32 %v418, %v419
        %vm428 = vcmask 257024
        %vm429 = vsmask.f32 7938
        %vm430 = vmand %vm428, %vm429
        %v431 = vld [vmem:[%s207] sm:$0xf]
        %v432 = vsel %vm430, %v386, %v431
        %433 = vst [vmem:[%s207] sm:$0xf] %v432
        %v434 = vld [vmem:[%s207 + $0x4] sm:$0xf]
        %v435 = vsel %vm430, %v393, %v434
        %436 = vst [vmem:[%s207 + $0x4] sm:$0xf] %v435
        %v437 = vld [vmem:[%s207 + $0x8] sm:$0xf]
        %v438 = vsel %vm430, %v400, %v437
        %439 = vst [vmem:[%s207 + $0x8] sm:$0xf] %v438
        %v440 = vld [vmem:[%s207 + $0xc] sm:$0xf]
        %v441 = vsel %vm430, %v407, %v440
        %442 = vst [vmem:[%s207 + $0xc] sm:$0xf] %v441
        %v443 = vld [vmem:[%s207 + $0x10] sm:$0xf]
        %v444 = vsel %vm430, %v414, %v443
        %445 = vst [vmem:[%s207 + $0x10] sm:$0xf] %v444
        %v446 = vld [vmem:[%s207 + $0x14] sm:$0xf]
        %v447 = vsel %vm430, %v421, %v446
        %448 = vst [vmem:[%s207 + $0x14] sm:$0xf] %v447
        %v449 = vld [vmem:[%s183 + $0x7] sm:$0x1]
        %vm450 = vcmask 253952
        %451 = vst.msk [vmem:[#allocation2] sm:$0x1] %vm450, %v449
        %s452 = sand.u32 %s107, 1
        %s453 = scalar_lea.sflag [#allocation5], %s452
        %s454 = sand.u32 %s107, 1
        %s455 = smul.addr %s454, 24
        %s456 = scalar_lea.vmem [#allocation8], %s455
        // Predicated region
        $region41: #{tpu_custom_call.1} parent=27 // pred_check
          %p457 = pneg %p117
        $region42: #{tpu_custom_call.1} parent=27 // pred_check_branch
          %459 = sbr.rel (%p457) target = $region44
        $region43: #{tpu_custom_call.1} parent=27 // pred_region
          %s461 = ssub.s32 384, 384
          %462 = vsyncadd %s453, %s461
          %s463 = sadd.s32 %s26, %s27
          %s464 = sadd.s32 %s463, %s25
          %s465 = smul.addr %s464, 64
          %s466 = scalar_lea.hbm %s2, %s465
          %s467 = sshll.u32 %s456, 4
          %s468 = int_to_ptr.vmem [resolvable:$true] %s467
          %473 = dma.vmem_to_hbm [thread:$0]  %s468, 384, %s466, %s453, 64, 128, 4
        $region44: #{tpu_custom_call.1} parent=27 // pred_fallthru
          _
      $region28: #{tpu_custom_call.1} parent=5 // pred_fallthru
        _
      %p474 = scmp.le.s32.totalorder 2, %s15
      // Predicated region
      $region45: #{tpu_custom_call.1} parent=5 // pred_check
        %p475 = pneg %p474
      $region46: #{tpu_custom_call.1} parent=5 // pred_check_branch
        %477 = sbr.rel (%p475) target = $region48
      $region47: #{tpu_custom_call.1} parent=5 // pred_region
        %s478 = ssub.s32 %s15, 2
        // Predicated region
        $region49: #{tpu_custom_call.1} parent=47 // pred_check
          %p479 = pneg %p123
        $region50: #{tpu_custom_call.1} parent=47 // pred_check_branch
          %481 = sbr.rel (%p479) target = $region52
        $region51: #{tpu_custom_call.1} parent=47 // pred_region
          %s482 = sand.u32 %s108, 1
          %s483 = scalar_lea.sflag [#allocation5], %s482
          %s484 = sand.u32 %s108, 1
          %s485 = smul.addr %s484, 24
          %s486 = scalar_lea.vmem [#allocation8], %s485
          %487 = dma.done %s483, 384
        $region52: #{tpu_custom_call.1} parent=47 // pred_fallthru
          _
      $region48: #{tpu_custom_call.1} parent=5 // pred_fallthru
        _
    $region6: #{tpu_custom_call.1} parent=1 // loop_footer
      %s19 = sadd.s32 1, %s15
    $region7: #{tpu_custom_call.1} parent=1 // loop_footer_branch
      %14 = sbr.rel target = $region3
    $region8: #{tpu_custom_call.1} parent=1 // loop_exit
      _
    %488 = vsyncpa [#allocation4], 1
    %s489 = scalar_lea.sflag [#allocation4], 1
    %490 = vsyncpa %s489, 1
    %491 = vsyncpa [#allocation7], 1
    %492 = vsyncpa [#allocation5], 1
    %s493 = scalar_lea.sflag [#allocation5], 1
    %494 = vsyncpa %s493, 1

</llo_original>
